<compile_context>
chip_gen: v7x
topology: tpu7x:2x2x1
jax: 0.10.0
libtpu: 0.0.40
codegen_flags: <defaults>
</compile_context>

<pallas_src>
import jax
import jax.numpy as jnp
from jax.experimental import pallas as pl
from jax.experimental.pallas import tpu as pltpu

_LANES = 128

# Enum constants with string fallbacks for older jax versions.
_ARBITRARY = getattr(pltpu, "ARBITRARY", "arbitrary")
_CORE_PARALLEL = getattr(pltpu, "CORE_PARALLEL", "parallel")


def _chip_generation():
    """Best-effort TPU generation detection (never raises)."""
    try:
        kind = jax.devices()[0].device_kind.lower()
    except Exception:
        kind = ""
    if "7" in kind:
        return "v7x"
    if "v6" in kind:
        return "v6e"
    if "v5" in kind and ("lite" in kind or "5e" in kind):
        return "v5e"
    return "other"


def _tuning_for(gen, itemsize):
    """Per-generation target block bytes and TensorCore count."""
    target_block_bytes = {
        "v5e": 2 << 20,   # most HBM-bound + smallest default scoped VMEM
        "v6e": 4 << 20,
        "v7x": 4 << 20,   # 2 inputs x 2 bufs x 4 MiB = 16 MiB << 64 MiB VMEM
    }.get(gen, 2 << 20)
    target_rows = target_block_bytes // (_LANES * itemsize)
    num_cores = 2 if gen == "v7x" else 1
    return int(target_rows), num_cores


def _sublane_rows(itemsize):
    """Row-packing granularity: 8 rows for 4B dtypes, 16 for 2B, 32 for 1B."""
    return max(8, (4 // itemsize) * 8)


def _make_l1_sum_kernel(rows, tile_rows, acc_rows, total_blocks,
                        blocks_per_core, needs_tail_mask, split_cores):
    """Kernel factory closing over static tiling parameters."""

    def _fold(diff):
        # Fold rows to one (acc_rows, 128) partial: pure VPU adds with
        # acc_rows/8 independent chains (ILP), no per-step XLU reduction.
        return jnp.sum(diff.reshape(-1, acc_rows, _LANES), axis=0)

    def kernel(pred_ref, gt_ref, out_ref):
        if split_cores:
            c = pl.program_id(0)
            i = pl.program_id(1)
            gb = c * blocks_per_core + i   # logical (unclamped) block index
        else:
            i = pl.program_id(0)
            gb = i

        @pl.when(i == 0)
        def _init():
            out_ref[...] = jnp.zeros_like(out_ref)

        def _accumulate():
            diff = jnp.abs(pred_ref[...].astype(jnp.float32)
                           - gt_ref[...].astype(jnp.float32))
            if needs_tail_mask:
                is_tail = gb == total_blocks - 1

                @pl.when(jnp.logical_not(is_tail))
                def _():
                    out_ref[...] += _fold(diff).reshape(out_ref.shape)

                @pl.when(is_tail)
                def _():
                    # Mask rows past the real array.  Must be a select (not a
                    # multiply): the clipped DMA leaves garbage/NaN beyond the
                    # valid rows.
                    row_ids = gb * tile_rows + jax.lax.broadcasted_iota(
                        jnp.int32, diff.shape, 0)
                    masked = jnp.where(row_ids < rows, diff, 0.0)
                    out_ref[...] += _fold(masked).reshape(out_ref.shape)
            else:
                out_ref[...] += _fold(diff).reshape(out_ref.shape)

        if split_cores:
            # Skip duplicated (index-clamped) blocks entirely: no compute and
            # no accumulate for logically out-of-range blocks.
            pl.when(gb < total_blocks)(_accumulate)
        else:
            _accumulate()

    return kernel


def supervised_l1_loss(pc_source, pc_target, pred_flow, gt_flow):
    """mean(|pred_flow - gt_flow|); pc_source / pc_target unused (as in PyTorch)."""
    del pc_source, pc_target  # unused, matching the reference module
    assert pred_flow.shape == gt_flow.shape

    numel = pred_flow.size
    out_dtype = jnp.promote_types(pred_flow.dtype, gt_flow.dtype)

    item_p = jnp.dtype(pred_flow.dtype).itemsize
    item_g = jnp.dtype(gt_flow.dtype).itemsize
    granule_rows = max(_sublane_rows(item_p), _sublane_rows(item_g))
    granule = granule_rows * _LANES

    flat_p = pred_flow.reshape(-1)
    flat_g = gt_flow.reshape(-1)

    # Sublane-aligned prefix goes through the kernel; the tiny unaligned tail
    # (< granule elements) is summed in XLA.  No jnp.pad copy of the inputs.
    rows = (numel // granule) * granule_rows
    aligned = rows * _LANES

    if aligned < numel:
        tail = jnp.sum(jnp.abs(flat_p[aligned:].astype(jnp.float32)
                               - flat_g[aligned:].astype(jnp.float32)))
    else:
        tail = jnp.float32(0.0)

    if rows == 0:
        total = tail
    else:
        gen = _chip_generation()
        target_rows, num_cores = _tuning_for(gen, max(item_p, item_g))
        tile_rows = min(target_rows, rows)          # multiple of granule_rows
        total_blocks = int(pl.cdiv(rows, tile_rows))
        if total_blocks < 2:
            num_cores = 1                           # never split tiny inputs
        blocks_per_core = int(pl.cdiv(total_blocks, num_cores))
        needs_tail_mask = (rows % tile_rows) != 0

        # Accumulator height: as much sublane ILP as the tile allows.
        if tile_rows % 32 == 0:
            acc_rows = 32
        elif tile_rows % 16 == 0:
            acc_rows = 16
        else:
            acc_rows = 8

        pred2d = flat_p[:aligned].reshape(rows, _LANES)
        gt2d = flat_g[:aligned].reshape(rows, _LANES)

        block_bytes = tile_rows * _LANES * (item_p + item_g)
        vmem_limit = int(min(max(2 * block_bytes + (16 << 20), 32 << 20),
                             48 << 20))
        cost = pl.CostEstimate(
            flops=3 * rows * _LANES,
            transcendentals=0,
            bytes_accessed=rows * _LANES * (item_p + item_g))

        kernel = _make_l1_sum_kernel(
            rows, tile_rows, acc_rows, total_blocks,
            blocks_per_core, needs_tail_mask, split_cores=(num_cores == 2))

        if num_cores == 1:
            partials = pl.pallas_call(
                kernel,
                out_shape=jax.ShapeDtypeStruct((acc_rows, _LANES), jnp.float32),
                grid=(total_blocks,),
                in_specs=[
                    pl.BlockSpec((tile_rows, _LANES), lambda i: (i, 0)),
                    pl.BlockSpec((tile_rows, _LANES), lambda i: (i, 0)),
                ],
                out_specs=pl.BlockSpec((acc_rows, _LANES), lambda i: (0, 0)),
                compiler_params=pltpu.CompilerParams(
                    dimension_semantics=(_ARBITRARY,),
                    vmem_limit_bytes=vmem_limit),
                cost_estimate=cost,
            )(pred2d, gt2d)
        else:
            last_block = total_blocks - 1

            def in_map(c, i):
                # Clamp so no DMA starts fully out of bounds; the kernel skips
                # the (logically OOB) duplicated blocks entirely.
                return (jnp.minimum(c * blocks_per_core + i, last_block), 0)

            partials = pl.pallas_call(
                kernel,
                out_shape=jax.ShapeDtypeStruct(
                    (num_cores, acc_rows, _LANES), jnp.float32),
                grid=(num_cores, blocks_per_core),
                in_specs=[
                    pl.BlockSpec((tile_rows, _LANES), in_map),
                    pl.BlockSpec((tile_rows, _LANES), in_map),
                ],
                out_specs=pl.BlockSpec((1, acc_rows, _LANES),
                                       lambda c, i: (c, 0, 0)),
                compiler_params=pltpu.CompilerParams(
                    dimension_semantics=(_CORE_PARALLEL, _ARBITRARY),
                    vmem_limit_bytes=vmem_limit),
                cost_estimate=cost,
            )(pred2d, gt2d)

        # Single tiny cross-lane reduction done in XLA.
        total = jnp.sum(partials) + tail

    # numel is a Python int: division stays in f32 (weak typing).
    return (total / numel).astype(out_dtype)


if __name__ == "__main__":
    key = jax.random.PRNGKey(0)
    k1, k2, k3, k4 = jax.random.split(key, 4)

    B, C, N = 2, 3, 512  # (batch, xyz, num_points) scene-flow layout
    pc_source = jax.random.normal(k1, (B, C, N), dtype=jnp.float32)
    pc_target = jax.random.normal(k2, (B, C, N), dtype=jnp.float32)
    pred_flow = jax.random.normal(k3, (B, C, N), dtype=jnp.float32)
    gt_flow = jax.random.normal(k4, (B, C, N), dtype=jnp.float32)

    loss = supervised_l1_loss(pc_source, pc_target, pred_flow, gt_flow)
    loss = jax.block_until_ready(loss)

    # Sanity check against plain-JAX reference.
    ref = jnp.mean(jnp.abs(pred_flow - gt_flow))
    assert jnp.allclose(loss, ref, rtol=1e-5, atol=1e-6), (loss, ref)

    # Extra check: unaligned-size path (tail handled in XLA, ragged tile mask).
    M = 5 * 1000 + 37  # not a multiple of 8*128
    xp = jax.random.normal(k1, (M,), dtype=jnp.float32)
    xg = jax.random.normal(k2, (M,), dtype=jnp.float32)
    loss2 = jax.block_until_ready(supervised_l1_loss(None, None, xp, xg))
    ref2 = jnp.mean(jnp.abs(xp - xg))
    assert jnp.allclose(loss2, ref2, rtol=1e-5, atol=1e-6), (loss2, ref2)

    print("KERNEL_OK")
</pallas_src>

<mosaic_0001>
module attributes {stable_mosaic.version = 11 : i64} {
  func.func @kernel(%arg0: i32, %arg1: memref<24x128xf32, #tpu.memory_space<vmem>>, %arg2: memref<24x128xf32, #tpu.memory_space<vmem>>, %arg3: memref<8x128xf32, #tpu.memory_space<vmem>>) attributes {dimension_semantics = [#tpu.dimension_semantics<arbitrary>], iteration_bounds = array<i64: 1>, scalar_prefetch = 0 : i64, scratch_operands = 0 : i64, tpu.core_type = #tpu.core_type<tc>, window_params = [{transform_indices = @transform_0, window_bounds = array<i64: 24, 128>}, {transform_indices = @transform_1, window_bounds = array<i64: 24, 128>}, {pipeline_mode = #tpu.pipeline_mode<synchronous>, transform_indices = @transform_2, window_bounds = array<i64: 8, 128>}]} {
    %c0_i32 = arith.constant 0 : i32
    %0 = arith.cmpi eq, %arg0, %c0_i32 : i32
    %1 = arith.extui %0 : i1 to i32
    %c0_i32_0 = arith.constant 0 : i32
    %2 = arith.cmpi ne, %1, %c0_i32_0 : i32
    scf.if %2 {
      %cst_8 = arith.constant 0.000000e+00 : f32
      %12 = vector.broadcast %cst_8 : f32 to vector<8x128xf32>
      %c0_9 = arith.constant 0 : index
      %c0_10 = arith.constant 0 : index
      %13 = vector.load %arg3[%c0_9, %c0_10] : memref<8x128xf32, #tpu.memory_space<vmem>>, vector<8x128xf32>
      tpu.vector_store %arg3[%c0_9, %c0_10], %12 {strides = array<i32>} : memref<8x128xf32, #tpu.memory_space<vmem>>, vector<8x128xf32>,
    } else {
    }
    %c0 = arith.constant 0 : index
    %c0_1 = arith.constant 0 : index
    %3 = vector.load %arg1[%c0, %c0_1] : memref<24x128xf32, #tpu.memory_space<vmem>>, vector<24x128xf32>
    %c0_2 = arith.constant 0 : index
    %c0_3 = arith.constant 0 : index
    %4 = vector.load %arg2[%c0_2, %c0_3] : memref<24x128xf32, #tpu.memory_space<vmem>>, vector<24x128xf32>
    %5 = arith.subf %3, %4 : vector<24x128xf32>
    %6 = math.absf %5 : vector<24x128xf32>
    %c0_4 = arith.constant 0 : index
    %c0_5 = arith.constant 0 : index
    %7 = vector.load %arg3[%c0_4, %c0_5] : memref<8x128xf32, #tpu.memory_space<vmem>>, vector<8x128xf32>
    %8 = vector.shape_cast %6 : vector<24x128xf32> to vector<3x8x128xf32>
    %cst = arith.constant dense<0.000000e+00> : vector<8x128xf32>
    %9 = vector.multi_reduction <add>, %8, %cst [0] : vector<3x8x128xf32> to vector<8x128xf32>
    %10 = arith.addf %7, %9 : vector<8x128xf32>
    %c0_6 = arith.constant 0 : index
    %c0_7 = arith.constant 0 : index
    %11 = vector.load %arg3[%c0_6, %c0_7] : memref<8x128xf32, #tpu.memory_space<vmem>>, vector<8x128xf32>
    tpu.vector_store %arg3[%c0_6, %c0_7], %10 {strides = array<i32>} : memref<8x128xf32, #tpu.memory_space<vmem>>, vector<8x128xf32>,
    return
  }
  func.func @transform_0(%arg0: i32) -> (i32, i32) {
    %c0_i32 = arith.constant 0 : i32
    %c0_i32_0 = arith.constant 0 : i32
    return %arg0, %c0_i32 : i32, i32
  }
  func.func @transform_1(%arg0: i32) -> (i32, i32) {
    %c0_i32 = arith.constant 0 : i32
    %c0_i32_0 = arith.constant 0 : i32
    return %arg0, %c0_i32 : i32, i32
  }
  func.func @transform_2(%arg0: i32) -> (i32, i32) {
    %c0_i32 = arith.constant 0 : i32
    %c0_i32_0 = arith.constant 0 : i32
    %c0_i32_1 = arith.constant 0 : i32
    return %c0_i32, %c0_i32_0 : i32, i32
  }
}

</mosaic_0001>

<llo_original>
// kernel: tpu_custom_call.1
$region0: #{tpu_custom_call.1}
  #allocation0 [shape = 'u32[]', space=smem, size = 0x4, offset = 0x4, fixed_abs, tag = 'smem constant byte address 0x4 - core index']
  #allocation1 [shape = 'u32[144,128]{1,0:T(1,128)}', space=vmem, size = 0x12000, scoped, tag = 'internal scratch']
  %s0 = inlined_call_operand.hbm [shape: f32[24,128], index: 0, kind: input, shape index: {}]
  %s1 = inlined_call_operand.hbm [shape: f32[24,128], index: 1, kind: input, shape index: {}]
  %s2 = inlined_call_operand.hbm [shape: f32[8,128], index: 2, kind: output, shape index: {}]
  %s3 = sld [smem:[#allocation0]]
  $region30: #{tpu_custom_call.1} parent=0
    _
  %s5 = ssub.s32 1, %s3
  %s6 = scalar_select 0, %s5, %s3
  $region1: #{tpu_custom_call.1} parent=0
    #allocation2 [shape = 'u8[12288]{0}', space=vmem, size = 0x3000, scoped, tag = 'input window, operand 0, single buffered']
    #allocation3 [shape = 's32[1]{0}', space=sflag, size = 0x4, scoped, tag = 'scoped memory for tpu_custom_call.1']
    #allocation4 [shape = 's32[1]{0}', space=sflag, size = 0x4, scoped, tag = 'scoped memory for tpu_custom_call.1']
    #allocation5 [shape = 'u8[12288]{0}', space=vmem, size = 0x3000, scoped, tag = 'input window, operand 1, single buffered']
    #allocation6 [shape = 's32[1]{0}', space=sflag, size = 0x4, scoped, tag = 'scoped memory for tpu_custom_call.1']
    #allocation7 [shape = 'u8[4096]{0}', space=vmem, size = 0x1000, scoped, tag = 'output window, operand 0, single buffered']
    %7 = vsyncpa [#allocation3], 0
    %8 = vsyncpa [#allocation6], 0
    %9 = vsyncpa [#allocation4], 0
    // Predicated region
    $region2: #{tpu_custom_call.1} parent=1 // pred_check
      _
    $region3: #{tpu_custom_call.1} parent=1 // pred_check_branch
      %11 = sbr.rel (0) target = $region5
    $region4: #{tpu_custom_call.1} parent=1 // pred_region
      %s13 = ssub.s32 384, 384
      %14 = vsyncadd [#allocation3], %s13
      %s15 = sshll.u32 [#allocation2], 4
      %s16 = int_to_ptr.vmem [resolvable:$true] %s15
      %21 = dma.hbm_to_vmem [thread:$0]  %s0, 384, %s16, [#allocation3], 128, 128, 8
    $region5: #{tpu_custom_call.1} parent=1 // pred_fallthru
      _
    // Predicated region
    $region6: #{tpu_custom_call.1} parent=1 // pred_check
      _
    $region7: #{tpu_custom_call.1} parent=1 // pred_check_branch
      %23 = sbr.rel (0) target = $region9
    $region8: #{tpu_custom_call.1} parent=1 // pred_region
      %s25 = ssub.s32 384, 384
      %26 = vsyncadd [#allocation6], %s25
      %s27 = sshll.u32 [#allocation5], 4
      %s28 = int_to_ptr.vmem [resolvable:$true] %s27
      %33 = dma.hbm_to_vmem [thread:$0]  %s1, 384, %s28, [#allocation6], 128, 128, 8
    $region9: #{tpu_custom_call.1} parent=1 // pred_fallthru
      _
    // Predicated region
    $region10: #{tpu_custom_call.1} parent=1 // pred_check
      _
    $region11: #{tpu_custom_call.1} parent=1 // pred_check_branch
      %35 = sbr.rel (0) target = $region13
    $region12: #{tpu_custom_call.1} parent=1 // pred_region
      %36 = dma.done [#allocation3], 384
    $region13: #{tpu_custom_call.1} parent=1 // pred_fallthru
      _
    // Predicated region
    $region14: #{tpu_custom_call.1} parent=1 // pred_check
      _
    $region15: #{tpu_custom_call.1} parent=1 // pred_check_branch
      %38 = sbr.rel (0) target = $region17
    $region16: #{tpu_custom_call.1} parent=1 // pred_region
      %39 = dma.done [#allocation6], 384
    $region17: #{tpu_custom_call.1} parent=1 // pred_fallthru
      _
    %p40 = scmp.eq.s32.totalorder 0, 0
    // Predicated region
    $region18: #{tpu_custom_call.1} parent=1 // pred_check
      %p41 = pneg %p40
    $region19: #{tpu_custom_call.1} parent=1 // pred_check_branch
      %43 = sbr.rel (%p41) target = $region21
    $region20: #{tpu_custom_call.1} parent=1 // pred_region
      %44 = vst [vmem:[#allocation7] sm:$0xff] 0.0
    $region21: #{tpu_custom_call.1} parent=1 // pred_fallthru
      _
    %v45 = vld [vmem:[#allocation2] sm:$0xff]
    %v46 = vld [vmem:[#allocation2 + $0x8] sm:$0xff]
    %v47 = vld [vmem:[#allocation2 + $0x10] sm:$0xff]
    %v48 = vld [vmem:[#allocation5] sm:$0xff]
    %v49 = vld [vmem:[#allocation5 + $0x8] sm:$0xff]
    %v50 = vld [vmem:[#allocation5 + $0x10] sm:$0xff]
    %v51 = vsub.f32 %v45, %v48
    %v52 = vsub.f32 %v46, %v49
    %v53 = vsub.f32 %v47, %v50
    %v54 = vand.u32 2147483647, %v51
    %v55 = vand.u32 2147483647, %v52
    %v56 = vand.u32 2147483647, %v53
    %v57 = vld [vmem:[#allocation7] sm:$0xff]
    %v58 = vadd.f32 %v54, %v55
    %v59 = vadd.f32 %v58, %v56
    %v60 = vadd.f32 %v57, %v59
    %61 = vst [vmem:[#allocation7] sm:$0xff] %v60
    // Predicated region
    $region22: #{tpu_custom_call.1} parent=1 // pred_check
      _
    $region23: #{tpu_custom_call.1} parent=1 // pred_check_branch
      %63 = sbr.rel (0) target = $region25
    $region24: #{tpu_custom_call.1} parent=1 // pred_region
      %s65 = ssub.s32 128, 128
      %66 = vsyncadd [#allocation4], %s65
      %s68 = sshll.u32 [#allocation7], 4
      %s69 = int_to_ptr.vmem [resolvable:$true] %s68
      %71 = dma.vmem_to_hbm [thread:$0]  %s69, 128, %s2, [#allocation4]
    $region25: #{tpu_custom_call.1} parent=1 // pred_fallthru
      _
    // Predicated region
    $region26: #{tpu_custom_call.1} parent=1 // pred_check
      _
    $region27: #{tpu_custom_call.1} parent=1 // pred_check_branch
      %73 = sbr.rel (0) target = $region29
    $region28: #{tpu_custom_call.1} parent=1 // pred_region
      %74 = dma.done [#allocation4], 128
    $region29: #{tpu_custom_call.1} parent=1 // pred_fallthru
      _
    %75 = vsyncpa [#allocation3], 1
    %76 = vsyncpa [#allocation6], 1
    %77 = vsyncpa [#allocation4], 1

</llo_original>
